<compile_context>
chip_gen: v5e
topology: v5e:2x2
jax: 0.10.0
libtpu: 0.0.40
codegen_flags: <defaults>
</compile_context>

<pallas_src>
import numpy as np
import jax
import jax.numpy as jnp
from jax import lax
from jax.experimental import pallas as pl
from jax.experimental.pallas import tpu as pltpu

LEAKY_SLOPE = 0.01   # InPlaceABNSync default activation: leaky_relu(slope=0.01)
BN_EPS = 1e-5
SIZES = (1, 2, 3, 6)
SS_TOTAL = sum(s * s for s in SIZES)       # 1 + 4 + 9 + 36 = 50
SS_PAD = 64                                # pad 50 -> 64 for clean sublane tiles
MATMUL_DTYPE = jnp.bfloat16                # MXU operand dtype (f32 accumulate)


def _leaky_relu(x):
    return jnp.where(x >= 0, x, LEAKY_SLOPE * x)


def _vmem_limit_bytes():
    """Raise the scoped-VMEM limit (defaults 16/32 MiB) but stay below physical."""
    try:
        cap = pltpu.get_tpu_info().vmem_capacity_bytes
        return int(cap * 0.8)
    except Exception:
        return 48 * 1024 * 1024   # safe on v5e/v6e (128 MiB) and v7x (64 MiB)


# --------------------------------------------------------------------------
# Small constant matrices built in numpy (glue, not the hot path).
# --------------------------------------------------------------------------
def adaptive_pool_matrix(in_size, out_size):
    """Row-stochastic matrix M (out, in) s.t. M @ x == AdaptiveAvgPool1d(x)."""
    m = np.zeros((out_size, in_size), np.float32)
    for i in range(out_size):
        start = (i * in_size) // out_size
        end = -(-((i + 1) * in_size) // out_size)  # ceil
        m[i, start:end] = 1.0 / (end - start)
    return m


def bilinear_matrix(out_size, in_size):
    """Matrix B (out, in) implementing 1-D bilinear resize, align_corners=True."""
    m = np.zeros((out_size, in_size), np.float32)
    if in_size == 1:
        m[:, 0] = 1.0
        return m
    if out_size == 1:
        m[0, 0] = 1.0
        return m
    scale = (in_size - 1) / (out_size - 1)
    for o in range(out_size):
        src = o * scale
        i0 = int(np.floor(src))
        i1 = min(i0 + 1, in_size - 1)
        frac = src - i0
        m[o, i0] += 1.0 - frac
        m[o, i1] += frac
    return m


def _psp_constants(H, W, cout):
    """Stacked pool matrix (SS_PAD, HW), stacked upsample matrix (HW, SS_PAD)
    and the row/column block mask (SS_PAD, 4*cout); padded rows/cols are zero."""
    p_all = np.zeros((SS_PAD, H * W), np.float32)
    u_all = np.zeros((H * W, SS_PAD), np.float32)
    mask = np.zeros((SS_PAD, len(SIZES) * cout), np.float32)
    off = 0
    for i, s in enumerate(SIZES):
        ah = adaptive_pool_matrix(H, s)              # (s, H)
        aw = adaptive_pool_matrix(W, s)              # (s, W)
        p_all[off:off + s * s] = np.kron(ah, aw)     # (s*s, H*W)
        bh = bilinear_matrix(H, s)                   # (H, s)
        bw = bilinear_matrix(W, s)                   # (W, s)
        u_all[:, off:off + s * s] = np.kron(bh, bw)  # (H*W, s*s)
        mask[off:off + s * s, i * cout:(i + 1) * cout] = 1.0
        off += s * s
    return p_all, u_all, mask


def _pick_hw_tile(HW, C):
    """Largest 128-multiple HW tile dividing HW whose bf16 input block ~<= 2 MiB."""
    if HW % 128 != 0:
        return HW
    budget = 2 * 1024 * 1024
    cap = max(128, (budget // (C * 2)) // 128 * 128)
    t = min(HW, cap)
    while t > 128 and HW % t != 0:
        t -= 128
    return t if HW % t == 0 else HW


def _pick_row_tile(H):
    """Row tile for kernel B (multiple of 8, at least 2 tiles when possible)."""
    for t in (16, 8):
        if H % t == 0 and H // t >= 2:
            return t
    return H


# --------------------------------------------------------------------------
# Kernel A: all four pyramid stages fused (pool -> 1x1 conv -> BN -> leaky),
# spatially tiled over HW with a VMEM accumulator for the pooled sums.
# --------------------------------------------------------------------------
def _stages_pool_kernel(x_ref, p_ref, w_ref, scale_ref, bias_ref, mask_ref,
                        y_ref, pooled_acc):
    """
    x_ref:      (1, T_HW, C) bf16     input tile (channels-last, flattened HW)
    p_ref:      (SS_PAD, T_HW) bf16   stacked adaptive-pool matrices
    w_ref:      (C, 4*Cout) bf16      stacked 1x1 conv weights
    scale_ref:  (1, 4*Cout) f32       folded BN scale
    bias_ref:   (1, 4*Cout) f32       folded BN bias
    mask_ref:   (SS_PAD, 4*Cout) f32  stage block mask (0/1)
    y_ref:      (1, SS_PAD, 4*Cout)   output: per-stage activated features (bf16)
    pooled_acc: VMEM (SS_PAD, C) f32  partial pooled sums across HW tiles
    """
    t = pl.program_id(1)

    @pl.when(t == 0)
    def _init():
        pooled_acc[...] = jnp.zeros_like(pooled_acc)

    pooled_acc[...] += jnp.dot(p_ref[...], x_ref[0],
                               preferred_element_type=jnp.float32)

    @pl.when(t == pl.num_programs(1) - 1)
    def _finalize():
        z = jnp.dot(pooled_acc[...].astype(MATMUL_DTYPE), w_ref[...],
                    preferred_element_type=jnp.float32)        # (SS_PAD, 4*Cout)
        z = z * scale_ref[...] + bias_ref[...]                 # f32 epilogue
        z = _leaky_relu(z)
        y_ref[0] = (z * mask_ref[...]).astype(y_ref.dtype)


def _run_stages(x_flat, p_all, w_cat, scale_cat, bias_cat, mask):
    N, HW, C = x_flat.shape
    c4 = w_cat.shape[1]
    t_hw = _pick_hw_tile(HW, C)
    n_t = HW // t_hw
    return pl.pallas_call(
        _stages_pool_kernel,
        out_shape=jax.ShapeDtypeStruct((N, SS_PAD, c4), MATMUL_DTYPE),
        grid=(N, n_t),
        in_specs=[
            pl.BlockSpec((1, t_hw, C), lambda n, t: (n, t, 0)),
            pl.BlockSpec((SS_PAD, t_hw), lambda n, t: (0, t)),
            pl.BlockSpec((C, c4), lambda n, t: (0, 0)),
            pl.BlockSpec((1, c4), lambda n, t: (0, 0)),
            pl.BlockSpec((1, c4), lambda n, t: (0, 0)),
            pl.BlockSpec((SS_PAD, c4), lambda n, t: (0, 0)),
        ],
        out_specs=pl.BlockSpec((1, SS_PAD, c4), lambda n, t: (n, 0, 0)),
        scratch_shapes=[pltpu.VMEM((SS_PAD, C), jnp.float32)],
        compiler_params=pltpu.CompilerParams(
            dimension_semantics=("parallel", "arbitrary"),
            vmem_limit_bytes=_vmem_limit_bytes()),
    )(x_flat, p_all, w_cat, scale_cat, bias_cat, mask)


# --------------------------------------------------------------------------
# Kernel B: fused bilinear upsample (all stages) + implicit channel concat +
# 3x3 conv (pad=1, no bias) + BN + leaky, tiled over output rows with a
# 1-row halo.  x arrives row-padded (H+2) in HBM; the haloed row window is
# fetched with a manual DMA.
# --------------------------------------------------------------------------
def _run_bottleneck(y_cat, u_pad, x_pad, w_b, scale, bias, tr):
    N, Hp2, W, C = x_pad.shape
    H = Hp2 - 2
    ss = u_pad.shape[2]
    c4 = y_cat.shape[2]
    K = w_b.shape[2]                     # = c4 + C  (torch.cat order: stages, feats)
    cout = w_b.shape[3]
    n_r = H // tr

    def kernel(y_ref, u_ref, w_ref, scale_ref, bias_ref, x_hbm, o_ref,
               cat_scr, x_scr, acc_scr, sem):
        """
        y_ref:   (1, SS_PAD, c4) bf16   per-stage activated features (kernel A out)
        u_ref:   (H+2, W, SS_PAD) bf16  row-padded stacked bilinear matrices (VMEM resident)
        w_ref:   (3, 3, K, cout) bf16   3x3 weight over the concatenated channels
        scale_ref/bias_ref: (1, cout) f32  folded BN
        x_hbm:   (N, H+2, W, C) bf16    row-padded features, left in HBM (pl.ANY)
        o_ref:   (1, TR, W, cout) f32
        cat_scr: VMEM (TR+2, W, K) bf16     [upsampled stages | x] for the haloed rows
        x_scr:   VMEM (TR+2, W, C) bf16     DMA landing buffer for the x row window
        acc_scr: VMEM (TR, W+2, cout) f32   width-padded conv accumulator
        """
        n = pl.program_id(0)
        r = pl.program_id(1)
        row0 = pl.multiple_of(r * tr, tr)        # start row in the padded image

        # Kick off the haloed-x DMA; overlap it with the upsample matmul.
        cp = pltpu.make_async_copy(x_hbm.at[n, pl.ds(row0, tr + 2)], x_scr, sem)
        cp.start()

        # Fused bilinear upsample (align_corners=True) of all four stages,
        # for the TR+2 haloed rows only.
        u_rows = u_ref[pl.ds(row0, tr + 2)]                     # (TR+2, W, SS_PAD)
        up = jnp.dot(u_rows.reshape((tr + 2) * W, ss), y_ref[0],
                     preferred_element_type=jnp.float32)        # ((TR+2)*W, c4)
        cat_scr[:, :, :c4] = up.reshape(tr + 2, W, c4).astype(cat_scr.dtype)

        cp.wait()
        cat_scr[:, :, c4:] = x_scr[...]          # implicit torch.cat([stages, feats])

        # 3x3 conv with padding=1:
        #   * dy -> row slices of the haloed scratch (halo rows are zero at image
        #     borders thanks to the wrapper-side row padding)
        #   * dx -> accumulate the dy-summed full-width matmul result into the
        #     width-padded accumulator at column offsets {0,1,2}; out-of-bounds
        #     contributions land in the two discard columns.
        acc_scr[...] = jnp.zeros_like(acc_scr)
        for dx in (-1, 0, 1):
            zsum = None
            for dy in (-1, 0, 1):
                lhs = cat_scr[1 + dy:1 + dy + tr].reshape(tr * W, K)
                z = jnp.dot(lhs, w_ref[dy + 1, dx + 1],
                            preferred_element_type=jnp.float32)
                zsum = z if zsum is None else zsum + z
            lo = 1 - dx
            acc_scr[:, lo:lo + W, :] += zsum.reshape(tr, W, cout)

        conv = acc_scr[:, 1:W + 1, :]                           # drop pad columns
        o_ref[0] = _leaky_relu(conv * scale_ref[...] + bias_ref[...]
                               ).astype(o_ref.dtype)

    return pl.pallas_call(
        kernel,
        out_shape=jax.ShapeDtypeStruct((N, H, W, cout), jnp.float32),
        grid=(N, n_r),
        in_specs=[
            pl.BlockSpec((1, SS_PAD, c4), lambda n, r: (n, 0, 0)),
            pl.BlockSpec((Hp2, W, ss), lambda n, r: (0, 0, 0)),
            pl.BlockSpec((3, 3, K, cout), lambda n, r: (0, 0, 0, 0)),
            pl.BlockSpec((1, cout), lambda n, r: (0, 0)),
            pl.BlockSpec((1, cout), lambda n, r: (0, 0)),
            pl.BlockSpec(memory_space=pl.ANY),
        ],
        out_specs=pl.BlockSpec((1, tr, W, cout), lambda n, r: (n, r, 0, 0)),
        scratch_shapes=[
            pltpu.VMEM((tr + 2, W, K), MATMUL_DTYPE),
            pltpu.VMEM((tr + 2, W, C), MATMUL_DTYPE),
            pltpu.VMEM((tr, W + 2, cout), jnp.float32),
            pltpu.SemaphoreType.DMA,
        ],
        compiler_params=pltpu.CompilerParams(
            dimension_semantics=("parallel", "parallel"),
            vmem_limit_bytes=_vmem_limit_bytes()),
    )(y_cat, u_pad, w_b, scale, bias, x_pad)


# --------------------------------------------------------------------------
# Parameter init (deterministic, synthetic) and forward pass
# --------------------------------------------------------------------------
def _fold_bn(kg, kb, km, kv, c):
    gamma = 1.0 + 0.1 * jax.random.normal(kg, (c,), jnp.float32)
    beta = 0.1 * jax.random.normal(kb, (c,), jnp.float32)
    mean = 0.1 * jax.random.normal(km, (c,), jnp.float32)
    var = jax.random.uniform(kv, (c,), jnp.float32, minval=0.5, maxval=1.5)
    scale = gamma / jnp.sqrt(var + BN_EPS)
    bias = beta - mean * scale
    return scale.reshape(1, -1), bias.reshape(1, -1)


def init_params(key, features, out_features):
    params = {"stages": []}
    for i in range(len(SIZES)):
        k = jax.random.fold_in(key, i)
        kw, kg, kb, km, kv = jax.random.split(k, 5)
        w = 0.1 * jax.random.normal(kw, (features, out_features), jnp.float32)
        scale, bias = _fold_bn(kg, kb, km, kv, out_features)
        params["stages"].append({"w": w, "scale": scale, "bias": bias})
    cin = features + len(SIZES) * out_features
    k = jax.random.fold_in(key, 1000)
    kw, kg, kb, km, kv = jax.random.split(k, 5)
    w = 0.1 * jax.random.normal(kw, (3, 3, cin, out_features), jnp.float32)
    scale, bias = _fold_bn(kg, kb, km, kv, out_features)
    params["bottleneck"] = {"w": w, "scale": scale, "bias": bias}
    return params


def psp_forward(feats_nchw, params):
    """feats_nchw: (N, C, H, W) float32, returns (N, out_features, H, W)."""
    # Cast fused into the NCHW->NHWC transpose: x is bf16 for both kernels.
    x = jnp.transpose(feats_nchw, (0, 2, 3, 1)).astype(MATMUL_DTYPE)   # NHWC bf16
    N, H, W, C = x.shape
    x_flat = x.reshape(N, H * W, C)
    cout = params["stages"][0]["w"].shape[1]
    c4 = len(SIZES) * cout

    p_all_np, u_all_np, mask_np = _psp_constants(H, W, cout)
    p_all = jnp.asarray(p_all_np, MATMUL_DTYPE)                        # (SS_PAD, HW)
    mask = jnp.asarray(mask_np, jnp.float32)                           # (SS_PAD, c4)
    u_pad_np = np.zeros((H + 2, W, SS_PAD), np.float32)                # row-padded
    u_pad_np[1:H + 1] = u_all_np.reshape(H, W, SS_PAD)
    u_pad = jnp.asarray(u_pad_np, MATMUL_DTYPE)

    w_cat = jnp.concatenate([sp["w"] for sp in params["stages"]],
                            axis=1).astype(MATMUL_DTYPE)               # (C, 4*Cout)
    scale_cat = jnp.concatenate([sp["scale"] for sp in params["stages"]], axis=1)
    bias_cat = jnp.concatenate([sp["bias"] for sp in params["stages"]], axis=1)

    # Kernel A: all four pyramid stages in one call (x read from HBM once).
    y_cat = _run_stages(x_flat, p_all, w_cat, scale_cat, bias_cat, mask)

    # Kernel B: fused upsample + (implicit) concat + 3x3 conv + BN + leaky,
    # row-tiled with a 1-row halo; x gets a zero row on each side so halo
    # windows are fixed-size and image-border padding is automatic.
    x_pad = jnp.pad(x, ((0, 0), (1, 1), (0, 0), (0, 0)))               # (N, H+2, W, C)
    bp = params["bottleneck"]
    w_b = bp["w"].astype(MATMUL_DTYPE)                                 # (3,3,c4+C,cout)
    tr = _pick_row_tile(H)
    out = _run_bottleneck(y_cat, u_pad, x_pad, w_b, bp["scale"], bp["bias"], tr)
    return jnp.transpose(out, (0, 3, 1, 2))                            # back to NCHW


# --------------------------------------------------------------------------
# Pure-JAX reference (mirrors the PyTorch forward semantics) for verification
# --------------------------------------------------------------------------
def psp_reference(feats_nchw, params):
    x = jnp.transpose(feats_nchw, (0, 2, 3, 1))
    N, H, W, C = x.shape
    priors = []
    for size, sp in zip(SIZES, params["stages"]):
        ah = adaptive_pool_matrix(H, size)
        aw = adaptive_pool_matrix(W, size)
        pooled = jnp.einsum('sh,tw,nhwc->nstc', ah, aw, x)
        y = jnp.einsum('nstc,cd->nstd', pooled, sp["w"])
        y = y * sp["scale"].reshape(1, 1, 1, -1) + sp["bias"].reshape(1, 1, 1, -1)
        y = _leaky_relu(y)
        bh = bilinear_matrix(H, size)
        bw = bilinear_matrix(W, size)
        up = jnp.einsum('hs,wt,nstd->nhwd', bh, bw, y)
        priors.append(up)
    priors.append(x)
    cat = jnp.concatenate(priors, axis=-1)
    bp = params["bottleneck"]
    out = lax.conv_general_dilated(
        cat, bp["w"], window_strides=(1, 1), padding=((1, 1), (1, 1)),
        dimension_numbers=('NHWC', 'HWIO', 'NHWC'))
    out = out * bp["scale"].reshape(1, 1, 1, -1) + bp["bias"].reshape(1, 1, 1, -1)
    out = _leaky_relu(out)
    return jnp.transpose(out, (0, 3, 1, 2))


if __name__ == "__main__":
    key = jax.random.PRNGKey(0)
    N, C, H, W = 2, 4, 16, 16        # small shapes: batch=2, features=4, spatial=16
    OUT_FEATURES = 8
    kx, kp = jax.random.split(key)
    feats = jax.random.normal(kx, (N, C, H, W), jnp.float32)   # NCHW, like PyTorch
    params = init_params(kp, C, OUT_FEATURES)

    out = psp_forward(feats, params)
    out = jax.block_until_ready(out)
    assert out.shape == (N, OUT_FEATURES, H, W), out.shape

    ref = psp_reference(feats, params)
    # bf16 MXU operands (f32 accumulation) vs. pure-f32 reference.
    np.testing.assert_allclose(np.asarray(out), np.asarray(ref),
                               atol=2e-2, rtol=2e-2)
    print("KERNEL_OK")
</pallas_src>

<mosaic_0001>
module attributes {stable_mosaic.version = 11 : i64} {
  func.func @_stages_pool_kernel(%arg0: i32, %arg1: i32, %arg2: memref<1x256x4xbf16, #tpu.memory_space<vmem>>, %arg3: memref<64x256xbf16, #tpu.memory_space<vmem>>, %arg4: memref<4x32xbf16, #tpu.memory_space<vmem>>, %arg5: memref<1x32xf32, #tpu.memory_space<vmem>>, %arg6: memref<1x32xf32, #tpu.memory_space<vmem>>, %arg7: memref<64x32xf32, #tpu.memory_space<vmem>>, %arg8: memref<1x64x32xbf16, #tpu.memory_space<vmem>>, %arg9: memref<64x4xf32, #tpu.memory_space<vmem>>) attributes {dimension_semantics = [#tpu.dimension_semantics<parallel>, #tpu.dimension_semantics<arbitrary>], iteration_bounds = array<i64: 2, 1>, scalar_prefetch = 0 : i64, scratch_operands = 1 : i64, tpu.core_type = #tpu.core_type<tc>, window_params = [{transform_indices = @transform_0, window_bounds = array<i64: 1, 256, 4>}, {transform_indices = @transform_1, window_bounds = array<i64: 64, 256>}, {pipeline_mode = #tpu.pipeline_mode<synchronous>, transform_indices = @transform_2, window_bounds = array<i64: 4, 32>}, {pipeline_mode = #tpu.pipeline_mode<synchronous>, transform_indices = @transform_3, window_bounds = array<i64: 1, 32>}, {pipeline_mode = #tpu.pipeline_mode<synchronous>, transform_indices = @transform_4, window_bounds = array<i64: 1, 32>}, {pipeline_mode = #tpu.pipeline_mode<synchronous>, transform_indices = @transform_5, window_bounds = array<i64: 64, 32>}, {transform_indices = @transform_6, window_bounds = array<i64: 1, 64, 32>}]} {
    %c0_i32 = arith.constant 0 : i32
    %0 = arith.cmpi eq, %arg1, %c0_i32 : i32
    %1 = arith.extui %0 : i1 to i32
    %c0_i32_0 = arith.constant 0 : i32
    %2 = arith.cmpi ne, %1, %c0_i32_0 : i32
    scf.if %2 {
      %cst_11 = arith.constant 0.000000e+00 : f32
      %13 = vector.broadcast %cst_11 : f32 to vector<64x4xf32>
      %c0_12 = arith.constant 0 : index
      %c0_13 = arith.constant 0 : index
      %14 = vector.load %arg9[%c0_12, %c0_13] : memref<64x4xf32, #tpu.memory_space<vmem>>, vector<64x4xf32>
      tpu.vector_store %arg9[%c0_12, %c0_13], %13 {strides = array<i32>} : memref<64x4xf32, #tpu.memory_space<vmem>>, vector<64x4xf32>,
    } else {
    }
    %c0 = arith.constant 0 : index
    %c0_1 = arith.constant 0 : index
    %3 = vector.load %arg9[%c0, %c0_1] : memref<64x4xf32, #tpu.memory_space<vmem>>, vector<64x4xf32>
    %c0_2 = arith.constant 0 : index
    %c0_3 = arith.constant 0 : index
    %4 = vector.load %arg3[%c0_2, %c0_3] : memref<64x256xbf16, #tpu.memory_space<vmem>>, vector<64x256xbf16>
    %c0_4 = arith.constant 0 : index
    %c0_5 = arith.constant 0 : index
    %c0_6 = arith.constant 0 : index
    %5 = vector.load %arg2[%c0_4, %c0_5, %c0_6] : memref<1x256x4xbf16, #tpu.memory_space<vmem>>, vector<1x256x4xbf16>
    %6 = vector.shape_cast %5 : vector<1x256x4xbf16> to vector<256x4xbf16>
    %cst = arith.constant dense<0.000000e+00> : vector<64x4xf32>
    %7 = tpu.matmul %4, %6, %cst {dimension_numbers = #tpu.dot_dimension_numbers<[1], [0], [0], [1], [0, 0, 1, 1], [], []>} : vector<64x256xbf16>, vector<256x4xbf16>, vector<64x4xf32> -> vector<64x4xf32>
    %8 = arith.addf %3, %7 : vector<64x4xf32>
    %c0_7 = arith.constant 0 : index
    %c0_8 = arith.constant 0 : index
    %9 = vector.load %arg9[%c0_7, %c0_8] : memref<64x4xf32, #tpu.memory_space<vmem>>, vector<64x4xf32>
    tpu.vector_store %arg9[%c0_7, %c0_8], %8 {strides = array<i32>} : memref<64x4xf32, #tpu.memory_space<vmem>>, vector<64x4xf32>,
    %c0_i32_9 = arith.constant 0 : i32
    %10 = arith.cmpi eq, %arg1, %c0_i32_9 : i32
    %11 = arith.extui %10 : i1 to i32
    %c0_i32_10 = arith.constant 0 : i32
    %12 = arith.cmpi ne, %11, %c0_i32_10 : i32
    scf.if %12 {
      %c0_11 = arith.constant 0 : index
      %c0_12 = arith.constant 0 : index
      %13 = vector.load %arg9[%c0_11, %c0_12] : memref<64x4xf32, #tpu.memory_space<vmem>>, vector<64x4xf32>
      %14 = arith.truncf %13 : vector<64x4xf32> to vector<64x4xbf16>
      %c0_13 = arith.constant 0 : index
      %c0_14 = arith.constant 0 : index
      %15 = vector.load %arg4[%c0_13, %c0_14] : memref<4x32xbf16, #tpu.memory_space<vmem>>, vector<4x32xbf16>
      %cst_15 = arith.constant dense<0.000000e+00> : vector<64x32xf32>
      %16 = tpu.matmul %14, %15, %cst_15 {dimension_numbers = #tpu.dot_dimension_numbers<[1], [0], [0], [1], [0, 0, 1, 1], [], []>} : vector<64x4xbf16>, vector<4x32xbf16>, vector<64x32xf32> -> vector<64x32xf32>
      %c0_16 = arith.constant 0 : index
      %c0_17 = arith.constant 0 : index
      %17 = vector.load %arg5[%c0_16, %c0_17] : memref<1x32xf32, #tpu.memory_space<vmem>>, vector<1x32xf32>
      %18 = vector.broadcast %17 : vector<1x32xf32> to vector<64x32xf32>
      %19 = arith.mulf %16, %18 : vector<64x32xf32>
      %c0_18 = arith.constant 0 : index
      %c0_19 = arith.constant 0 : index
      %20 = vector.load %arg6[%c0_18, %c0_19] : memref<1x32xf32, #tpu.memory_space<vmem>>, vector<1x32xf32>
      %21 = vector.broadcast %20 : vector<1x32xf32> to vector<64x32xf32>
      %22 = arith.addf %19, %21 : vector<64x32xf32>
      %cst_20 = arith.constant 0.000000e+00 : f32
      %23 = vector.broadcast %cst_20 : f32 to vector<64x32xf32>
      %24 = arith.cmpf oge, %22, %23 : vector<64x32xf32>
      %cst_21 = arith.constant 0.00999999977 : f32
      %25 = vector.broadcast %cst_21 : f32 to vector<64x32xf32>
      %26 = arith.mulf %25, %22 : vector<64x32xf32>
      %27 = arith.select %24, %22, %26 : vector<64x32xi1>, vector<64x32xf32>
      %c0_22 = arith.constant 0 : index
      %c0_23 = arith.constant 0 : index
      %28 = vector.load %arg7[%c0_22, %c0_23] : memref<64x32xf32, #tpu.memory_space<vmem>>, vector<64x32xf32>
      %29 = arith.mulf %27, %28 : vector<64x32xf32>
      %30 = arith.truncf %29 : vector<64x32xf32> to vector<64x32xbf16>
      %c0_24 = arith.constant 0 : index
      %c0_25 = arith.constant 0 : index
      %c0_26 = arith.constant 0 : index
      %31 = vector.load %arg8[%c0_24, %c0_25, %c0_26] : memref<1x64x32xbf16, #tpu.memory_space<vmem>>, vector<1x64x32xbf16>
      %32 = vector.shape_cast %31 : vector<1x64x32xbf16> to vector<64x32xbf16>
      %33 = vector.shape_cast %30 : vector<64x32xbf16> to vector<1x64x32xbf16>
      tpu.vector_store %arg8[%c0_24, %c0_25, %c0_26], %33 {strides = array<i32>} : memref<1x64x32xbf16, #tpu.memory_space<vmem>>, vector<1x64x32xbf16>,
    } else {
    }
    return
  }
  func.func @transform_0(%arg0: i32, %arg1: i32) -> (i32, i32, i32) {
    %c0_i32 = arith.constant 0 : i32
    %c0_i32_0 = arith.constant 0 : i32
    return %arg0, %arg1, %c0_i32 : i32, i32, i32
  }
  func.func @transform_1(%arg0: i32, %arg1: i32) -> (i32, i32) {
    %c0_i32 = arith.constant 0 : i32
    %c0_i32_0 = arith.constant 0 : i32
    return %c0_i32, %arg1 : i32, i32
  }
  func.func @transform_2(%arg0: i32, %arg1: i32) -> (i32, i32) {
    %c0_i32 = arith.constant 0 : i32
    %c0_i32_0 = arith.constant 0 : i32
    %c0_i32_1 = arith.constant 0 : i32
    return %c0_i32, %c0_i32_0 : i32, i32
  }
  func.func @transform_3(%arg0: i32, %arg1: i32) -> (i32, i32) {
    %c0_i32 = arith.constant 0 : i32
    %c0_i32_0 = arith.constant 0 : i32
    %c0_i32_1 = arith.constant 0 : i32
    return %c0_i32, %c0_i32_0 : i32, i32
  }
  func.func @transform_4(%arg0: i32, %arg1: i32) -> (i32, i32) {
    %c0_i32 = arith.constant 0 : i32
    %c0_i32_0 = arith.constant 0 : i32
    %c0_i32_1 = arith.constant 0 : i32
    return %c0_i32, %c0_i32_0 : i32, i32
  }
  func.func @transform_5(%arg0: i32, %arg1: i32) -> (i32, i32) {
    %c0_i32 = arith.constant 0 : i32
    %c0_i32_0 = arith.constant 0 : i32
    %c0_i32_1 = arith.constant 0 : i32
    return %c0_i32, %c0_i32_0 : i32, i32
  }
  func.func @transform_6(%arg0: i32, %arg1: i32) -> (i32, i32, i32) {
    %c0_i32 = arith.constant 0 : i32
    %c0_i32_0 = arith.constant 0 : i32
    %c0_i32_1 = arith.constant 0 : i32
    return %arg0, %c0_i32, %c0_i32_0 : i32, i32, i32
  }
}

</mosaic_0001>

<llo_original>
// kernel: tpu_custom_call.1
$region0: #{tpu_custom_call.1}
  #allocation0 [shape = 'u32[]', space=smem, size = 0x4, offset = 0x4, fixed_abs, tag = 'smem constant byte address 0x4 - core index']
  #allocation1 [shape = 'u32[72,128]{1,0:T(1,128)}', space=vmem, size = 0x9000, scoped, tag = 'internal scratch']
  #allocation2 [shape = 'f32[64,4]{1,0:T(8,128)}', space=vmem, size = 0x8000, scoped, tag = 'scratch operand']
  %s0 = inlined_call_operand.vmem [shape: bf16[2,256,4], index: 0, kind: input, shape index: {}]
  %s1 = inlined_call_operand.vmem [shape: bf16[64,256], index: 1, kind: input, shape index: {}]
  %s2 = inlined_call_operand.vmem [shape: bf16[4,32], index: 2, kind: input, shape index: {}]
  %s3 = inlined_call_operand.vmem [shape: f32[1,32], index: 3, kind: input, shape index: {}]
  %s4 = inlined_call_operand.vmem [shape: f32[1,32], index: 4, kind: input, shape index: {}]
  %s5 = inlined_call_operand.vmem [shape: f32[64,32], index: 5, kind: input, shape index: {}]
  %s6 = inlined_call_operand.vmem [shape: bf16[2,64,32], index: 6, kind: output, shape index: {}]
  %s7 = sld [smem:[#allocation0]]
  $region65: #{tpu_custom_call.1} parent=0
    _
  %s9 = ssub.s32 1, %s7
  %s10 = scalar_select 0, %s9, %s7
  loop: start=0, step=1, limit=4
  $region2: #{tpu_custom_call.1} parent=0 // loop_pre_header
    _
  $region3: #{tpu_custom_call.1} parent=0 // loop_header
    %s12 = sphi 0, %s16
    %p13 = scmp.ge.s32.totalorder %s12, 4
    %s19 = sphi 0, %s31
    %s20 = sphi 0, %s27
    %s21 = sphi 0, %s19
    %s22 = sphi 0, %s20
    %s23 = sphi 0, %s21
    %s24 = sphi 0, %s22
    %s36 = sphi 0, %s38
    %s39 = sphi 0, %s36
    %s40 = sphi 0, %s39
    %s56 = sphi 0, %s40
    %s62 = sphi 0, %s64
    %s65 = sphi 0, %s62
    %s66 = sphi 0, %s65
    %s82 = sphi 0, %s66
    %s86 = sphi 0, %s86
    %s88 = sphi 0, %s86
    %s89 = sphi 0, %s88
    %s103 = sphi 0, %s89
    %s107 = sphi 0, %s107
    %s109 = sphi 0, %s107
    %s110 = sphi 0, %s109
    %s124 = sphi 0, %s110
    %s128 = sphi 0, %s128
    %s130 = sphi 0, %s128
    %s131 = sphi 0, %s130
    %s145 = sphi 0, %s131
    %s149 = sphi 0, %s149
    %s151 = sphi 0, %s149
    %s152 = sphi 0, %s151
    %s166 = sphi 0, %s152
    %s172 = sphi 0, %s174
    %s175 = sphi 0, %s172
    %s176 = sphi 0, %s175
    %s192 = sphi 0, %s176
  $region4: #{tpu_custom_call.1} parent=0 // loop_header_branch
    %15 = sbr.rel (%p13) target = $region8
  $region5: #{tpu_custom_call.1} parent=0 // loop_body
    %s17 = ssub.s32 %s12, 1
    %s18 = ssub.s32 %s12, 2
    %s25 = sadd.s32 1, %s20
    %p26 = scmp.ge.s32.totalorder %s25, 1
    %s27 = scalar_select %p26, 0, %s25
    %s28 = sadd.s32 1, %s19
    %s29 = scalar_select %p26, %s28, %s19
    %p30 = scmp.ge.s32.totalorder %s29, 2
    %s31 = scalar_select %p30, 0, %s29
    %s32 = ssub.s32 %s19, %s31
    %s33 = ssub.s32 %s20, %s27
    %s34 = sor.u32 %s32, %s33
    %p35 = scmp.eq.s32.totalorder %s34, 0
    %s37 = sadd.s32 %s36, 1
    %s38 = scalar_select %p35, %s36, %s37
    %p41 = pneg %p35
    %p42 = scmp.eq.s32.totalorder %s12, 1
    %p43 = por %p41, %p42
    %p44 = scmp.ne.s32.totalorder %s36, %s39
    %p45 = scmp.eq.s32.totalorder %s12, 0
    %p46 = por %p44, %p45
    %p47 = scmp.ne.s32.totalorder %s36, %s39
    %p48 = scmp.eq.s32.totalorder %s17, 1
    %p49 = por %p47, %p48
    %p50 = scmp.ne.s32.totalorder %s39, %s40
    %p51 = scmp.eq.s32.totalorder %s17, 0
    %p52 = por %p50, %p51
    %p53 = scmp.ne.s32.totalorder %s39, %s40
    %p54 = scmp.eq.s32.totalorder %s18, 1
    %p55 = por %p53, %p54
    %p57 = scmp.ne.s32.totalorder %s40, %s56
    %p58 = scmp.eq.s32.totalorder %s18, 0
    %p59 = por %p57, %p58
    %s60 = ssub.s32 %s20, %s27
    %p61 = scmp.eq.s32.totalorder %s60, 0
    %s63 = sadd.s32 %s62, 1
    %s64 = scalar_select %p61, %s62, %s63
    %p67 = pneg %p61
    %p68 = scmp.eq.s32.totalorder %s12, 1
    %p69 = por %p67, %p68
    %p70 = scmp.ne.s32.totalorder %s62, %s65
    %p71 = scmp.eq.s32.totalorder %s12, 0
    %p72 = por %p70, %p71
    %p73 = scmp.ne.s32.totalorder %s62, %s65
    %p74 = scmp.eq.s32.totalorder %s17, 1
    %p75 = por %p73, %p74
    %p76 = scmp.ne.s32.totalorder %s65, %s66
    %p77 = scmp.eq.s32.totalorder %s17, 0
    %p78 = por %p76, %p77
    %p79 = scmp.ne.s32.totalorder %s65, %s66
    %p80 = scmp.eq.s32.totalorder %s18, 1
    %p81 = por %p79, %p80
    %p83 = scmp.ne.s32.totalorder %s66, %s82
    %p84 = scmp.eq.s32.totalorder %s18, 0
    %p85 = por %p83, %p84
    %s87 = sadd.s32 %s86, 1
    %p90 = scmp.eq.s32.totalorder %s12, 1
    %p91 = scmp.ne.s32.totalorder %s86, %s88
    %p92 = scmp.eq.s32.totalorder %s12, 0
    %p93 = por %p91, %p92
    %p94 = scmp.ne.s32.totalorder %s86, %s88
    %p95 = scmp.eq.s32.totalorder %s17, 1
    %p96 = por %p94, %p95
    %p97 = scmp.ne.s32.totalorder %s88, %s89
    %p98 = scmp.eq.s32.totalorder %s17, 0
    %p99 = por %p97, %p98
    %p100 = scmp.ne.s32.totalorder %s88, %s89
    %p101 = scmp.eq.s32.totalorder %s18, 1
    %p102 = por %p100, %p101
    %p104 = scmp.ne.s32.totalorder %s89, %s103
    %p105 = scmp.eq.s32.totalorder %s18, 0
    %p106 = por %p104, %p105
    %s108 = sadd.s32 %s107, 1
    %p111 = scmp.eq.s32.totalorder %s12, 1
    %p112 = scmp.ne.s32.totalorder %s107, %s109
    %p113 = scmp.eq.s32.totalorder %s12, 0
    %p114 = por %p112, %p113
    %p115 = scmp.ne.s32.totalorder %s107, %s109
    %p116 = scmp.eq.s32.totalorder %s17, 1
    %p117 = por %p115, %p116
    %p118 = scmp.ne.s32.totalorder %s109, %s110
    %p119 = scmp.eq.s32.totalorder %s17, 0
    %p120 = por %p118, %p119
    %p121 = scmp.ne.s32.totalorder %s109, %s110
    %p122 = scmp.eq.s32.totalorder %s18, 1
    %p123 = por %p121, %p122
    %p125 = scmp.ne.s32.totalorder %s110, %s124
    %p126 = scmp.eq.s32.totalorder %s18, 0
    %p127 = por %p125, %p126
    %s129 = sadd.s32 %s128, 1
    %p132 = scmp.eq.s32.totalorder %s12, 1
    %p133 = scmp.ne.s32.totalorder %s128, %s130
    %p134 = scmp.eq.s32.totalorder %s12, 0
    %p135 = por %p133, %p134
    %p136 = scmp.ne.s32.totalorder %s128, %s130
    %p137 = scmp.eq.s32.totalorder %s17, 1
    %p138 = por %p136, %p137
    %p139 = scmp.ne.s32.totalorder %s130, %s131
    %p140 = scmp.eq.s32.totalorder %s17, 0
    %p141 = por %p139, %p140
    %p142 = scmp.ne.s32.totalorder %s130, %s131
    %p143 = scmp.eq.s32.totalorder %s18, 1
    %p144 = por %p142, %p143
    %p146 = scmp.ne.s32.totalorder %s131, %s145
    %p147 = scmp.eq.s32.totalorder %s18, 0
    %p148 = por %p146, %p147
    %s150 = sadd.s32 %s149, 1
    %p153 = scmp.eq.s32.totalorder %s12, 1
    %p154 = scmp.ne.s32.totalorder %s149, %s151
    %p155 = scmp.eq.s32.totalorder %s12, 0
    %p156 = por %p154, %p155
    %p157 = scmp.ne.s32.totalorder %s149, %s151
    %p158 = scmp.eq.s32.totalorder %s17, 1
    %p159 = por %p157, %p158
    %p160 = scmp.ne.s32.totalorder %s151, %s152
    %p161 = scmp.eq.s32.totalorder %s17, 0
    %p162 = por %p160, %p161
    %p163 = scmp.ne.s32.totalorder %s151, %s152
    %p164 = scmp.eq.s32.totalorder %s18, 1
    %p165 = por %p163, %p164
    %p167 = scmp.ne.s32.totalorder %s152, %s166
    %p168 = scmp.eq.s32.totalorder %s18, 0
    %p169 = por %p167, %p168
    %s170 = ssub.s32 %s19, %s31
    %p171 = scmp.eq.s32.totalorder %s170, 0
    %s173 = sadd.s32 %s172, 1
    %s174 = scalar_select %p171, %s172, %s173
    %p177 = pneg %p171
    %p178 = scmp.eq.s32.totalorder %s12, 1
    %p179 = por %p177, %p178
    %p180 = scmp.ne.s32.totalorder %s172, %s175
    %p181 = scmp.eq.s32.totalorder %s12, 0
    %p182 = por %p180, %p181
    %p183 = scmp.ne.s32.totalorder %s172, %s175
    %p184 = scmp.eq.s32.totalorder %s17, 1
    %p185 = por %p183, %p184
    %p186 = scmp.ne.s32.totalorder %s175, %s176
    %p187 = scmp.eq.s32.totalorder %s17, 0
    %p188 = por %p186, %p187
    %p189 = scmp.ne.s32.totalorder %s175, %s176
    %p190 = scmp.eq.s32.totalorder %s18, 1
    %p191 = por %p189, %p190
    %p193 = scmp.ne.s32.totalorder %s176, %s192
    %p194 = scmp.eq.s32.totalorder %s18, 0
    %p195 = por %p193, %p194
    %p196 = scmp.le.s32.totalorder 1, %s12
    %p197 = scmp.lt.s32.totalorder %s12, 3
    %p198 = pnand %p196, %p197
    %p199 = pneg %p198
    // Predicated region
    $region9: #{tpu_custom_call.1} parent=5 // pred_check
      _
    $region10: #{tpu_custom_call.1} parent=5 // pred_check_branch
      %201 = sbr.rel (%p198) target = $region12
    $region11: #{tpu_custom_call.1} parent=5 // pred_region
      %s202 = ssub.s32 %s12, 1
      // Predicated region
      $region13: #{tpu_custom_call.1} parent=11 // pred_check
        %p203 = pneg %p78
      $region14: #{tpu_custom_call.1} parent=11 // pred_check_branch
        %205 = sbr.rel (%p203) target = $region16
      $region15: #{tpu_custom_call.1} parent=11 // pred_region
        %s206 = smul.u32 2, %s22
        %p207 = scmp.lt.s32.totalorder %s206, 1
        %s208 = scalar_select %p207, %s206, 1
        %s209 = smul.addr %s208, 4
        %s210 = scalar_lea.vmem %s1, %s209
        %s211 = smul.u32 2, %s22
      $region16: #{tpu_custom_call.1} parent=11 // pred_fallthru
        _
      // Predicated region
      $region17: #{tpu_custom_call.1} parent=11 // pred_check
        %p212 = pneg %p99
      $region18: #{tpu_custom_call.1} parent=11 // pred_check_branch
        %214 = sbr.rel (%p212) target = $region20
      $region19: #{tpu_custom_call.1} parent=11 // pred_region
        _
      $region20: #{tpu_custom_call.1} parent=11 // pred_fallthru
        _
      // Predicated region
      $region21: #{tpu_custom_call.1} parent=11 // pred_check
        %p215 = pneg %p120
      $region22: #{tpu_custom_call.1} parent=11 // pred_check_branch
        %217 = sbr.rel (%p215) target = $region24
      $region23: #{tpu_custom_call.1} parent=11 // pred_region
        _
      $region24: #{tpu_custom_call.1} parent=11 // pred_fallthru
        _
      // Predicated region
      $region25: #{tpu_custom_call.1} parent=11 // pred_check
        %p218 = pneg %p141
      $region26: #{tpu_custom_call.1} parent=11 // pred_check_branch
        %220 = sbr.rel (%p218) target = $region28
      $region27: #{tpu_custom_call.1} parent=11 // pred_region
        _
      $region28: #{tpu_custom_call.1} parent=11 // pred_fallthru
        _
      // Predicated region
      $region29: #{tpu_custom_call.1} parent=11 // pred_check
        %p221 = pneg %p162
      $region30: #{tpu_custom_call.1} parent=11 // pred_check_branch
        %223 = sbr.rel (%p221) target = $region32
      $region31: #{tpu_custom_call.1} parent=11 // pred_region
        _
      $region32: #{tpu_custom_call.1} parent=11 // pred_fallthru
        _
    $region12: #{tpu_custom_call.1} parent=5 // pred_fallthru
      _
    %p224 = scmp.lt.s32.totalorder %s12, 2
    // Predicated region
    $region33: #{tpu_custom_call.1} parent=5 // pred_check
      %p225 = pneg %p224
    $region34: #{tpu_custom_call.1} parent=5 // pred_check_branch
      %227 = sbr.rel (%p225) target = $region36
    $region35: #{tpu_custom_call.1} parent=5 // pred_region
      // Predicated region
      $region37: #{tpu_custom_call.1} parent=35 // pred_check
        %p228 = pneg %p46
      $region38: #{tpu_custom_call.1} parent=35 // pred_check_branch
        %230 = sbr.rel (%p228) target = $region40
      $region39: #{tpu_custom_call.1} parent=35 // pred_region
        %s231 = smul.u32 32, %s20
        %p232 = scmp.lt.s32.totalorder %s19, 1
        %s233 = scalar_select %p232, %s19, 1
        %p234 = scmp.lt.s32.totalorder %s231, 31
        %s235 = scalar_select %p234, %s231, 31
        %s236 = smul.addr %s233, 32
        %s237 = sadd.s32 %s235, %s236
        %s238 = smul.addr %s237, 4
        %s239 = scalar_lea.vmem %s0, %s238
        %s240 = smul.u32 32, %s20
      $region40: #{tpu_custom_call.1} parent=35 // pred_fallthru
        _
    $region36: #{tpu_custom_call.1} parent=5 // pred_fallthru
      _
    %p241 = scmp.le.s32.totalorder 1, %s12
    %p242 = scmp.lt.s32.totalorder %s12, 3
    %p243 = pnand %p241, %p242
    %p244 = pneg %p243
    // Predicated region
    $region41: #{tpu_custom_call.1} parent=5 // pred_check
      _
    $region42: #{tpu_custom_call.1} parent=5 // pred_check_branch
      %246 = sbr.rel (%p243) target = $region44
    $region43: #{tpu_custom_call.1} parent=5 // pred_region
      %s247 = ssub.s32 %s12, 1
      %s248 = smul.u32 32, %s22
      %p249 = scmp.lt.s32.totalorder %s21, 1
      %s250 = scalar_select %p249, %s21, 1
      %p251 = scmp.lt.s32.totalorder %s248, 31
      %s252 = scalar_select %p251, %s248, 31
      %s253 = smul.addr %s250, 32
      %s254 = sadd.s32 %s252, %s253
      %s255 = smul.addr %s254, 4
      %s256 = scalar_lea.vmem %s0, %s255
      %p257 = pneg %p52
      %p258 = pneg %p49
      %s259 = smul.u32 2, %s22
      %p260 = scmp.lt.s32.totalorder %s259, 1
      %s261 = scalar_select %p260, %s259, 1
      %s262 = smul.addr %s261, 4
      %s263 = scalar_lea.vmem %s1, %s262
      %p264 = pneg %p78
      %p265 = pneg %p75
      %p266 = pneg %p99
      %p267 = pneg %p96
      %p268 = pneg %p120
      %p269 = pneg %p117
      %p270 = pneg %p141
      %p271 = pneg %p138
      %p272 = pneg %p162
      %p273 = pneg %p159
      %p274 = pneg %p188
      %p275 = pneg %p185
      %p276 = scmp.lt.s32.totalorder %s21, 1
      %s277 = scalar_select %p276, %s21, 1
      %s278 = smul.addr %s277, 8
      %s279 = smul.addr %s278, 4
      %s280 = scalar_lea.vmem %s6, %s279
      %s281 = smul.u32 32, %s22
      %p282 = scmp.lt.s32.totalorder %s21, 1
      %s283 = scalar_select %p282, %s21, 1
      %p284 = scmp.lt.s32.totalorder %s281, 31
      %s285 = scalar_select %p284, %s281, 31
      %s286 = smul.addr %s283, 32
      %s287 = sadd.s32 %s285, %s286
      %s288 = smul.addr %s287, 4
      %s289 = scalar_lea.vmem %s0, %s288
      %s290 = smul.u32 32, %s22
      %s291 = smul.u32 2, %s22
      %p292 = scmp.lt.s32.totalorder %s291, 1
      %s293 = scalar_select %p292, %s291, 1
      %s294 = smul.addr %s293, 4
      %s295 = scalar_lea.vmem %s1, %s294
      %s296 = smul.u32 2, %s22
      %p297 = scmp.lt.s32.totalorder %s21, 1
      %s298 = scalar_select %p297, %s21, 1
      %s299 = smul.addr %s298, 8
      %s300 = smul.addr %s299, 4
      %s301 = scalar_lea.vmem %s6, %s300
      %p303 = scmp.eq.s32.totalorder %s22, 0
      // Predicated region
      $region45: #{tpu_custom_call.1} parent=43 // pred_check
        %p304 = pneg %p303
      $region46: #{tpu_custom_call.1} parent=43 // pred_check_branch
        %306 = sbr.rel (%p304) target = $region48
      $region47: #{tpu_custom_call.1} parent=43 // pred_region
        %vm307 = vcmask 31744
        %308 = vst.msk [vmem:[#allocation2] sm:$0xff] %vm307, 0.0
        %309 = vst.msk [vmem:[#allocation2 + $0x8] sm:$0xff] %vm307, 0.0
        %310 = vst.msk [vmem:[#allocation2 + $0x10] sm:$0xff] %vm307, 0.0
        %311 = vst.msk [vmem:[#allocation2 + $0x18] sm:$0xff] %vm307, 0.0
        %312 = vst.msk [vmem:[#allocation2 + $0x20] sm:$0xff] %vm307, 0.0
        %313 = vst.msk [vmem:[#allocation2 + $0x28] sm:$0xff] %vm307, 0.0
        %314 = vst.msk [vmem:[#allocation2 + $0x30] sm:$0xff] %vm307, 0.0
        %315 = vst.msk [vmem:[#allocation2 + $0x38] sm:$0xff] %vm307, 0.0
      $region48: #{tpu_custom_call.1} parent=43 // pred_fallthru
        _
      %v316 = vld [vmem:[#allocation2] sm:$0xff]
      %v317 = vld [vmem:[#allocation2 + $0x8] sm:$0xff]
      %v318 = vld [vmem:[#allocation2 + $0x10] sm:$0xff]
      %v319 = vld [vmem:[#allocation2 + $0x18] sm:$0xff]
      %v320 = vld [vmem:[#allocation2 + $0x20] sm:$0xff]
      %v321 = vld [vmem:[#allocation2 + $0x28] sm:$0xff]
      %v322 = vld [vmem:[#allocation2 + $0x30] sm:$0xff]
      %v323 = vld [vmem:[#allocation2 + $0x38] sm:$0xff]
      %v324 = vld [vmem:[%s295] sm:$0xff]
      %v325 = vld [vmem:[%s295 + $0x8] sm:$0xff]
      %v326 = vld [vmem:[%s295 + $0x10] sm:$0xff]
      %v327 = vld [vmem:[%s295 + $0x18] sm:$0xff]
      %v328 = vld [vmem:[%s295 + $0x20] sm:$0xff]
      %v329 = vld [vmem:[%s295 + $0x28] sm:$0xff]
      %v330 = vld [vmem:[%s295 + $0x30] sm:$0xff]
      %v331 = vld [vmem:[%s295 + $0x38] sm:$0xff]
      %v332 = vld [vmem:[%s289] sm:$0xf]
      %v333 = vld [vmem:[%s289 + $0x4] sm:$0xf]
      %v334 = vld [vmem:[%s289 + $0x8] sm:$0xf]
      %v335 = vld [vmem:[%s289 + $0xc] sm:$0xf]
      %v336 = vld [vmem:[%s289 + $0x10] sm:$0xf]
      %v337 = vld [vmem:[%s289 + $0x14] sm:$0xf]
      %v338 = vld [vmem:[%s289 + $0x18] sm:$0xf]
      %v339 = vld [vmem:[%s289 + $0x1c] sm:$0xf]
      %v340 = vld [vmem:[%s289 + $0x20] sm:$0xf]
      %v341 = vld [vmem:[%s289 + $0x24] sm:$0xf]
      %v342 = vld [vmem:[%s289 + $0x28] sm:$0xf]
      %v343 = vld [vmem:[%s289 + $0x2c] sm:$0xf]
      %v344 = vld [vmem:[%s289 + $0x30] sm:$0xf]
      %v345 = vld [vmem:[%s289 + $0x34] sm:$0xf]
      %v346 = vld [vmem:[%s289 + $0x38] sm:$0xf]
      %v347 = vld [vmem:[%s289 + $0x3c] sm:$0xf]
      %v348 = vld [vmem:[%s289 + $0x40] sm:$0xf]
      %v349 = vld [vmem:[%s289 + $0x44] sm:$0xf]
      %v350 = vld [vmem:[%s289 + $0x48] sm:$0xf]
      %v351 = vld [vmem:[%s289 + $0x4c] sm:$0xf]
      %v352 = vld [vmem:[%s289 + $0x50] sm:$0xf]
      %v353 = vld [vmem:[%s289 + $0x54] sm:$0xf]
      %v354 = vld [vmem:[%s289 + $0x58] sm:$0xf]
      %v355 = vld [vmem:[%s289 + $0x5c] sm:$0xf]
      %v356 = vld [vmem:[%s289 + $0x60] sm:$0xf]
      %v357 = vld [vmem:[%s289 + $0x64] sm:$0xf]
      %v358 = vld [vmem:[%s289 + $0x68] sm:$0xf]
      %v359 = vld [vmem:[%s289 + $0x6c] sm:$0xf]
      %v360 = vld [vmem:[%s289 + $0x70] sm:$0xf]
      %v361 = vld [vmem:[%s289 + $0x74] sm:$0xf]
      %v362 = vld [vmem:[%s289 + $0x78] sm:$0xf]
      %v363 = vld [vmem:[%s289 + $0x7c] sm:$0xf]
      %v372 = vunpack.c.l.b16 %v324
      %v373 = vunpack.c.h.b16 %v324
      %v374 = vunpack.c.l.b16 %v325
      %v375 = vunpack.c.h.b16 %v325
      %v376 = vunpack.c.l.b16 %v326
      %v377 = vunpack.c.h.b16 %v326
      %v378 = vunpack.c.l.b16 %v327
      %v379 = vunpack.c.h.b16 %v327
      %v380 = vunpack.c.l.b16 %v328
      %v381 = vunpack.c.h.b16 %v328
      %v382 = vunpack.c.l.b16 %v329
      %v383 = vunpack.c.h.b16 %v329
      %v384 = vunpack.c.l.b16 %v330
      %v385 = vunpack.c.h.b16 %v330
      %v386 = vunpack.c.l.b16 %v331
      %v387 = vunpack.c.h.b16 %v331
      %v388 = vpack.c.b16 %v374, %v372
      %v389 = vpack.c.b16 %v375, %v373
      %v390 = vpack.c.b16 %v378, %v376
      %v391 = vpack.c.b16 %v379, %v377
      %v392 = vpack.c.b16 %v382, %v380
      %v393 = vpack.c.b16 %v383, %v381
      %v394 = vpack.c.b16 %v386, %v384
      %v395 = vpack.c.b16 %v387, %v385
      %v436 = vunpack.c.l.b16 %v332
      %v437 = vunpack.c.l.b16 %v333
      %v438 = vunpack.c.l.b16 %v334
      %v439 = vunpack.c.l.b16 %v335
      %v440 = vunpack.c.l.b16 %v336
      %v441 = vunpack.c.l.b16 %v337
      %v442 = vunpack.c.l.b16 %v338
      %v443 = vunpack.c.l.b16 %v339
      %v444 = vunpack.c.l.b16 %v340
      %v445 = vunpack.c.l.b16 %v341
      %v446 = vunpack.c.l.b16 %v342
      %v447 = vunpack.c.l.b16 %v343
      %v448 = vunpack.c.l.b16 %v344
      %v449 = vunpack.c.l.b16 %v345
      %v450 = vunpack.c.l.b16 %v346
      %v451 = vunpack.c.l.b16 %v347
      %v452 = vunpack.c.l.b16 %v348
      %v453 = vunpack.c.l.b16 %v349
      %v454 = vunpack.c.l.b16 %v350
      %v455 = vunpack.c.l.b16 %v351
      %v456 = vunpack.c.l.b16 %v352
      %v457 = vunpack.c.l.b16 %v353
      %v458 = vunpack.c.l.b16 %v354
      %v459 = vunpack.c.l.b16 %v355
      %v460 = vunpack.c.l.b16 %v356
      %v461 = vunpack.c.l.b16 %v357
      %v462 = vunpack.c.l.b16 %v358
      %v463 = vunpack.c.l.b16 %v359
      %v464 = vunpack.c.l.b16 %v360
      %v465 = vunpack.c.l.b16 %v361
      %v466 = vunpack.c.l.b16 %v362
      %v467 = vunpack.c.l.b16 %v363
      %v468 = vpack.c.b16 %v437, %v436
      %v469 = vpack.c.b16 %v439, %v438
      %v470 = vpack.c.b16 %v441, %v440
      %v471 = vpack.c.b16 %v443, %v442
      %v472 = vpack.c.b16 %v445, %v444
      %v473 = vpack.c.b16 %v447, %v446
      %v474 = vpack.c.b16 %v449, %v448
      %v475 = vpack.c.b16 %v451, %v450
      %v476 = vpack.c.b16 %v453, %v452
      %v477 = vpack.c.b16 %v455, %v454
      %v478 = vpack.c.b16 %v457, %v456
      %v479 = vpack.c.b16 %v459, %v458
      %v480 = vpack.c.b16 %v461, %v460
      %v481 = vpack.c.b16 %v463, %v462
      %v482 = vpack.c.b16 %v465, %v464
      %v483 = vpack.c.b16 %v467, %v466
      %500 = vmatpush.bf16.msra.mxu0 %v475
      %501 = vmatpush.bf16.msra.mxu0 %v474
      %502 = vmatpush.bf16.msra.mxu0 %v473
      %503 = vmatpush.bf16.msra.mxu0 %v472
      %504 = vmatpush.bf16.msra.mxu0 %v471
      %505 = vmatpush.bf16.msra.mxu0 %v470
      %506 = vmatpush.bf16.msra.mxu0 %v469
      %507 = vmatpush.bf16.msra.mxu0 %v468
      %508 = vmatmul.bf16.gmra.mxu0 %v388
      %v509 = vpop.f32.mrf.mxu0
      %v510 = vadd.f32 0.0, %v509
      %v511 = vpop.f32.mrf.mxu0
      %v512 = vadd.f32 0.0, %v511
      %513 = vmatmul.bf16.gmra.mxu0 %v390
      %v514 = vpop.f32.mrf.mxu0
      %v515 = vadd.f32 0.0, %v514
      %v516 = vpop.f32.mrf.mxu0
      %v517 = vadd.f32 0.0, %v516
      %518 = vmatmul.bf16.gmra.mxu0 %v392
      %v519 = vpop.f32.mrf.mxu0
      %v520 = vadd.f32 0.0, %v519
      %v521 = vpop.f32.mrf.mxu0
      %v522 = vadd.f32 0.0, %v521
      %523 = vmatmul.bf16.gmra.mxu0 %v394
      %v524 = vpop.f32.mrf.mxu0
      %v525 = vadd.f32 0.0, %v524
      %v526 = vpop.f32.mrf.mxu0
      %v527 = vadd.f32 0.0, %v526
      %528 = vdwg.mxu0
      %529 = vmatpush.bf16.msra.mxu0 %v483
      %530 = vmatpush.bf16.msra.mxu0 %v482
      %531 = vmatpush.bf16.msra.mxu0 %v481
      %532 = vmatpush.bf16.msra.mxu0 %v480
      %533 = vmatpush.bf16.msra.mxu0 %v479
      %534 = vmatpush.bf16.msra.mxu0 %v478
      %535 = vmatpush.bf16.msra.mxu0 %v477
      %536 = vmatpush.bf16.msra.mxu0 %v476
      %537 = vmatmul.bf16.gmra.mxu0 %v389
      %v538 = vpop.f32.mrf.mxu0
      %v539 = vadd.f32 %v510, %v538
      %v540 = vpop.f32.mrf.mxu0
      %v541 = vadd.f32 %v512, %v540
      %542 = vmatmul.bf16.gmra.mxu0 %v391
      %v543 = vpop.f32.mrf.mxu0
      %v544 = vadd.f32 %v515, %v543
      %v545 = vpop.f32.mrf.mxu0
      %v546 = vadd.f32 %v517, %v545
      %547 = vmatmul.bf16.gmra.mxu0 %v393
      %v548 = vpop.f32.mrf.mxu0
      %v549 = vadd.f32 %v520, %v548
      %v550 = vpop.f32.mrf.mxu0
      %v551 = vadd.f32 %v522, %v550
      %552 = vmatmul.bf16.gmra.mxu0 %v395
      %v553 = vpop.f32.mrf.mxu0
      %v554 = vadd.f32 %v525, %v553
      %v555 = vpop.f32.mrf.mxu0
      %v556 = vadd.f32 %v527, %v555
      %557 = vdwg.mxu0
      %v558 = vadd.f32 %v316, %v539
      %v559 = vadd.f32 %v317, %v541
      %v560 = vadd.f32 %v318, %v544
      %v561 = vadd.f32 %v319, %v546
      %v562 = vadd.f32 %v320, %v549
      %v563 = vadd.f32 %v321, %v551
      %v564 = vadd.f32 %v322, %v554
      %v565 = vadd.f32 %v323, %v556
      %vm566 = vcmask 31744
      %567 = vst.msk [vmem:[#allocation2] sm:$0xff] %vm566, %v558
      %568 = vst.msk [vmem:[#allocation2 + $0x8] sm:$0xff] %vm566, %v559
      %569 = vst.msk [vmem:[#allocation2 + $0x10] sm:$0xff] %vm566, %v560
      %570 = vst.msk [vmem:[#allocation2 + $0x18] sm:$0xff] %vm566, %v561
      %571 = vst.msk [vmem:[#allocation2 + $0x20] sm:$0xff] %vm566, %v562
      %572 = vst.msk [vmem:[#allocation2 + $0x28] sm:$0xff] %vm566, %v563
      %573 = vst.msk [vmem:[#allocation2 + $0x30] sm:$0xff] %vm566, %v564
      %574 = vst.msk [vmem:[#allocation2 + $0x38] sm:$0xff] %vm566, %v565
      // Predicated region
      $region49: #{tpu_custom_call.1} parent=43 // pred_check
        %p575 = pneg %p303
      $region50: #{tpu_custom_call.1} parent=43 // pred_check_branch
        %577 = sbr.rel (%p575) target = $region52
      $region51: #{tpu_custom_call.1} parent=43 // pred_region
        %v578 = vld [vmem:[#allocation2] sm:$0xff]
        %v579 = vld [vmem:[#allocation2 + $0x8] sm:$0xff]
        %v580 = vld [vmem:[#allocation2 + $0x10] sm:$0xff]
        %v581 = vld [vmem:[#allocation2 + $0x18] sm:$0xff]
        %v582 = vld [vmem:[#allocation2 + $0x20] sm:$0xff]
        %v583 = vld [vmem:[#allocation2 + $0x28] sm:$0xff]
        %v584 = vld [vmem:[#allocation2 + $0x30] sm:$0xff]
        %v585 = vld [vmem:[#allocation2 + $0x38] sm:$0xff]
        %v586 = vpack.c.bf16 %v579, %v578
        %v587 = vpack.c.bf16 %v581, %v580
        %v588 = vpack.c.bf16 %v583, %v582
        %v589 = vpack.c.bf16 %v585, %v584
        %v590 = vld [vmem:[%s2] sm:$0x3]
        %v592 = vsel %vm566, %v586, 0
        %v595 = vsel %vm566, %v587, 0
        %v598 = vsel %vm566, %v588, 0
        %v601 = vsel %vm566, %v589, 0
        %vm603 = vcmask 1041408
        %v605 = vsel %vm603, %v590, 0
        %607 = vmatpush.bf16.msra.mxu0 0
        %608 = vmatpush.bf16.msra.mxu0 0
        %609 = vmatpush.bf16.msra.mxu0 0
        %610 = vmatpush.bf16.msra.mxu0 0
        %611 = vmatpush.bf16.msra.mxu0 0
        %612 = vmatpush.bf16.msra.mxu0 0
        %613 = vmatpush.bf16.msra.mxu0 0
        %614 = vmatpush.bf16.msra.mxu0 %v605
        %615 = vmatmul.bf16.gmra.mxu0 %v592
        %v616 = vpop.f32.mrf.mxu0
        %v617 = vadd.f32 0.0, %v616
        %v618 = vpop.f32.mrf.mxu0
        %v619 = vadd.f32 0.0, %v618
        %620 = vmatmul.bf16.gmra.mxu0 %v595
        %v621 = vpop.f32.mrf.mxu0
        %v622 = vadd.f32 0.0, %v621
        %v623 = vpop.f32.mrf.mxu0
        %v624 = vadd.f32 0.0, %v623
        %625 = vmatmul.bf16.gmra.mxu0 %v598
        %v626 = vpop.f32.mrf.mxu0
        %v627 = vadd.f32 0.0, %v626
        %v628 = vpop.f32.mrf.mxu0
        %v629 = vadd.f32 0.0, %v628
        %630 = vmatmul.bf16.gmra.mxu0 %v601
        %v631 = vpop.f32.mrf.mxu0
        %v632 = vadd.f32 0.0, %v631
        %v633 = vpop.f32.mrf.mxu0
        %v634 = vadd.f32 0.0, %v633
        %635 = vdwg.mxu0
        %v636 = vld [vmem:[%s3] sm:$0x1]
        %v638 = vperm.slane %v636, 0
        %v640 = vmul.f32 %v617, %v638
        %v641 = vmul.f32 %v619, %v638
        %v642 = vmul.f32 %v622, %v638
        %v643 = vmul.f32 %v624, %v638
        %v644 = vmul.f32 %v627, %v638
        %v645 = vmul.f32 %v629, %v638
        %v646 = vmul.f32 %v632, %v638
        %v647 = vmul.f32 %v634, %v638
        %v648 = vld [vmem:[%s4] sm:$0x1]
        %v650 = vperm.slane %v648, 0
        %v652 = vadd.f32 %v640, %v650
        %v653 = vadd.f32 %v641, %v650
        %v654 = vadd.f32 %v642, %v650
        %v655 = vadd.f32 %v643, %v650
        %v656 = vadd.f32 %v644, %v650
        %v657 = vadd.f32 %v645, %v650
        %v658 = vadd.f32 %v646, %v650
        %v659 = vadd.f32 %v647, %v650
        %vm660 = vcmp.ge.f32.partialorder %v652, 0.0
        %vm661 = vcmp.ge.f32.partialorder %v653, 0.0
        %vm662 = vcmp.ge.f32.partialorder %v654, 0.0
        %vm663 = vcmp.ge.f32.partialorder %v655, 0.0
        %vm664 = vcmp.ge.f32.partialorder %v656, 0.0
        %vm665 = vcmp.ge.f32.partialorder %v657, 0.0
        %vm666 = vcmp.ge.f32.partialorder %v658, 0.0
        %vm667 = vcmp.ge.f32.partialorder %v659, 0.0
        %v668 = vmul.f32 %v652, 0.01
        %v669 = vmul.f32 %v653, 0.01
        %v670 = vmul.f32 %v654, 0.01
        %v671 = vmul.f32 %v655, 0.01
        %v672 = vmul.f32 %v656, 0.01
        %v673 = vmul.f32 %v657, 0.01
        %v674 = vmul.f32 %v658, 0.01
        %v675 = vmul.f32 %v659, 0.01
        %v676 = vsel %vm660, %v652, %v668
        %v677 = vsel %vm661, %v653, %v669
        %v678 = vsel %vm662, %v654, %v670
        %v679 = vsel %vm663, %v655, %v671
        %v680 = vsel %vm664, %v656, %v672
        %v681 = vsel %vm665, %v657, %v673
        %v682 = vsel %vm666, %v658, %v674
        %v683 = vsel %vm667, %v659, %v675
        %v684 = vld [vmem:[%s5] sm:$0xff]
        %v685 = vld [vmem:[%s5 + $0x8] sm:$0xff]
        %v686 = vld [vmem:[%s5 + $0x10] sm:$0xff]
        %v687 = vld [vmem:[%s5 + $0x18] sm:$0xff]
        %v688 = vld [vmem:[%s5 + $0x20] sm:$0xff]
        %v689 = vld [vmem:[%s5 + $0x28] sm:$0xff]
        %v690 = vld [vmem:[%s5 + $0x30] sm:$0xff]
        %v691 = vld [vmem:[%s5 + $0x38] sm:$0xff]
        %v692 = vmul.f32 %v676, %v684
        %v693 = vmul.f32 %v677, %v685
        %v694 = vmul.f32 %v678, %v686
        %v695 = vmul.f32 %v679, %v687
        %v696 = vmul.f32 %v680, %v688
        %v697 = vmul.f32 %v681, %v689
        %v698 = vmul.f32 %v682, %v690
        %v699 = vmul.f32 %v683, %v691
        %v700 = vpack.c.bf16 %v692, %v692
        %v701 = vpack.c.bf16 %v693, %v693
        %v702 = vpack.c.bf16 %v694, %v694
        %v703 = vpack.c.bf16 %v695, %v695
        %v704 = vpack.c.bf16 %v696, %v696
        %v705 = vpack.c.bf16 %v697, %v697
        %v706 = vpack.c.bf16 %v698, %v698
        %v707 = vpack.c.bf16 %v699, %v699
        %vm708 = vcmask 257024
        %709 = vst.msk [vmem:[%s301] sm:$0xf] %vm708, %v700
        %710 = vst.msk [vmem:[%s301 + $0x4] sm:$0xf] %vm708, %v701
        %711 = vst.msk [vmem:[%s301 + $0x8] sm:$0xf] %vm708, %v702
        %712 = vst.msk [vmem:[%s301 + $0xc] sm:$0xf] %vm708, %v703
        %713 = vst.msk [vmem:[%s301 + $0x10] sm:$0xf] %vm708, %v704
        %714 = vst.msk [vmem:[%s301 + $0x14] sm:$0xf] %vm708, %v705
        %715 = vst.msk [vmem:[%s301 + $0x18] sm:$0xf] %vm708, %v706
        %716 = vst.msk [vmem:[%s301 + $0x1c] sm:$0xf] %vm708, %v707
      $region52: #{tpu_custom_call.1} parent=43 // pred_fallthru
        _
      %p717 = scmp.lt.s32.totalorder %s21, 1
      %s718 = scalar_select %p717, %s21, 1
      %s719 = smul.addr %s718, 8
      %s720 = smul.addr %s719, 4
      %s721 = scalar_lea.vmem %s6, %s720
      // Predicated region
      $region53: #{tpu_custom_call.1} parent=43 // pred_check
        %p722 = pneg %p185
      $region54: #{tpu_custom_call.1} parent=43 // pred_check_branch
        %724 = sbr.rel (%p722) target = $region56
      $region55: #{tpu_custom_call.1} parent=43 // pred_region
        _
      $region56: #{tpu_custom_call.1} parent=43 // pred_fallthru
        _
    $region44: #{tpu_custom_call.1} parent=5 // pred_fallthru
      _
    %p725 = scmp.le.s32.totalorder 2, %s12
    // Predicated region
    $region57: #{tpu_custom_call.1} parent=5 // pred_check
      %p726 = pneg %p725
    $region58: #{tpu_custom_call.1} parent=5 // pred_check_branch
      %728 = sbr.rel (%p726) target = $region60
    $region59: #{tpu_custom_call.1} parent=5 // pred_region
      %s729 = ssub.s32 %s12, 2
      // Predicated region
      $region61: #{tpu_custom_call.1} parent=59 // pred_check
        %p730 = pneg %p191
      $region62: #{tpu_custom_call.1} parent=59 // pred_check_branch
        %732 = sbr.rel (%p730) target = $region64
      $region63: #{tpu_custom_call.1} parent=59 // pred_region
        %p733 = scmp.lt.s32.totalorder %s23, 1
        %s734 = scalar_select %p733, %s23, 1
        %s735 = smul.addr %s734, 8
        %s736 = smul.addr %s735, 4
        %s737 = scalar_lea.vmem %s6, %s736
      $region64: #{tpu_custom_call.1} parent=59 // pred_fallthru
        _
    $region60: #{tpu_custom_call.1} parent=5 // pred_fallthru
      _
  $region6: #{tpu_custom_call.1} parent=0 // loop_footer
    %s16 = sadd.s32 1, %s12
  $region7: #{tpu_custom_call.1} parent=0 // loop_footer_branch
    %11 = sbr.rel target = $region3
  $region8: #{tpu_custom_call.1} parent=0 // loop_exit
    _

</llo_original>
